<compile_context>
chip_gen: v7x
topology: tpu7x:2x2x1
jax: 0.10.0
libtpu: 0.0.40
codegen_flags: <defaults>
</compile_context>

<pallas_src>
import jax
import jax.numpy as jnp
from jax import lax
from jax.experimental import pallas as pl
from jax.experimental.pallas import tpu as pltpu


# ----------------------------- Pallas kernel ------------------------------ #

def _stem_kernel(x_ref, w1_ref, b1_ref, w2_ref, b2_ref, o_ref):
    """Fused ConvBlock(3x3,s2) -> ConvBlock(3x3,s1) for a block of nb images.

    x_ref : (nb, M, 9*Cin) bf16  wrapper-built conv1 im2col (M = Ho*Wo)
    w1_ref: (9*Cin, C)     bf16  conv1 weights (BN scale folded in)
    b1_ref: (1, C)         f32   conv1 folded BN bias
    w2_ref: (9*C, C)       bf16  conv2 weights (BN scale folded in)
    b2_ref: (1, C)         f32   conv2 folded BN bias
    o_ref : (nb, Ho, Wo, C) f32  fused stem output
    """
    nb, M, K1 = x_ref.shape
    _, Ho, Wo, C = o_ref.shape

    # ---------------- conv1: one GEMM, K = 9*Cin ----------------
    x1 = x_ref[...].reshape(nb * M, K1)                       # bf16
    acc1 = jnp.dot(x1, w1_ref[...], preferred_element_type=jnp.float32)
    y1 = jnp.maximum(acc1 + b1_ref[...], 0.0)                 # (nb*M, C) f32

    # Intermediate activation stays on-core in bf16; zero-pad by 1 on each
    # spatial side by concatenating zero strips (border only -- no full-buffer
    # zeroing store, no VMEM scratch).
    y1b = y1.astype(jnp.bfloat16).reshape(nb, Ho, Wo, C)
    zrow = jnp.zeros((nb, 1, Wo, C), jnp.bfloat16)
    yp = jnp.concatenate([zrow, y1b, zrow], axis=1)           # (nb, Ho+2, Wo, C)
    zcol = jnp.zeros((nb, Ho + 2, 1, C), jnp.bfloat16)
    yp = jnp.concatenate([zcol, yp, zcol], axis=2)            # (nb, Ho+2, Wo+2, C)

    # ---------------- conv2: one GEMM, K = 9*C ----------------
    # Each spatial shift is materialized exactly once into the im2col;
    # column order = (ky, kx, cin), matching w2.reshape(9*C, C).
    taps = [yp[:, ky:ky + Ho, kx:kx + Wo, :].reshape(nb * M, C)
            for ky in range(3) for kx in range(3)]
    x2 = jnp.concatenate(taps, axis=-1)                       # (nb*M, 9*C) bf16
    acc2 = jnp.dot(x2, w2_ref[...], preferred_element_type=jnp.float32)
    y2 = jnp.maximum(acc2 + b2_ref[...], 0.0)                 # (nb*M, C) f32

    o_ref[...] = y2.reshape(nb, Ho, Wo, C).astype(o_ref.dtype)


# ------------------------------ Wrapper ------------------------------------ #

def _pick_nb(n):
    """Images per grid step: amortize per-step overhead while keeping >= 2 grid
    steps when possible so both v7x TensorCores get work."""
    if n <= 2:
        return 1
    for nb in range(n // 2, 0, -1):
        if n % nb == 0:
            return nb
    return 1


def _im2col_conv1(x_nhwc, ho, wo):
    """Wrapper-side im2col for conv1 (3x3, stride 2, pad 1).
    Returns (N, ho*wo, 9*Cin); column order = (ky, kx, cin)."""
    n, _, _, cin = x_nhwc.shape
    xp = jnp.pad(x_nhwc, ((0, 0), (1, 1), (1, 1), (0, 0)))
    cols = []
    for ky in range(3):
        for kx in range(3):
            sl = xp[:, ky:ky + 2 * ho:2, kx:kx + 2 * wo:2, :]  # (N, ho, wo, Cin)
            cols.append(sl.reshape(n, ho * wo, cin))
    return jnp.concatenate(cols, axis=-1)                      # (N, ho*wo, 9*Cin)


@jax.jit
def stem_forward(x_nchw, w1, scale1, bias1, w2, scale2, bias2):
    N, c_in, H, W = x_nchw.shape
    KH, KW, _, C = w1.shape
    assert KH == 3 and KW == 3
    ho = (H + 2 - 3) // 2 + 1        # conv1: k=3, stride=2, pad=1
    wo = (W + 2 - 3) // 2 + 1        # conv2 (k=3, s=1, p=1) keeps this size
    M = ho * wo
    nb = _pick_nb(N)

    # NCHW (PyTorch) -> NHWC, build conv1 im2col in the wrapper, cast to bf16.
    x_nhwc = jnp.transpose(x_nchw, (0, 2, 3, 1))
    x1col = _im2col_conv1(x_nhwc, ho, wo).astype(jnp.bfloat16)   # (N, M, 9*Cin)

    # Fold BN scale into conv weights; kernel epilogue = bias + ReLU only.
    w1f = (w1 * scale1).reshape(9 * c_in, C).astype(jnp.bfloat16)
    w2f = (w2 * scale2).reshape(9 * C, C).astype(jnp.bfloat16)
    b1 = bias1.reshape(1, C).astype(jnp.float32)
    b2 = bias2.reshape(1, C).astype(jnp.float32)

    out = pl.pallas_call(
        _stem_kernel,
        out_shape=jax.ShapeDtypeStruct((N, ho, wo, C), jnp.float32),
        grid_spec=pltpu.PrefetchScalarGridSpec(
            num_scalar_prefetch=0,
            grid=(N // nb,),
            in_specs=[
                pl.BlockSpec((nb, M, 9 * c_in), lambda n: (n, 0, 0)),
                pl.BlockSpec((9 * c_in, C), lambda n: (0, 0)),
                pl.BlockSpec((1, C), lambda n: (0, 0)),
                pl.BlockSpec((9 * C, C), lambda n: (0, 0)),
                pl.BlockSpec((1, C), lambda n: (0, 0)),
            ],
            out_specs=pl.BlockSpec((nb, ho, wo, C), lambda n: (n, 0, 0, 0)),
        ),
        compiler_params=pltpu.CompilerParams(
            dimension_semantics=("parallel",),
            vmem_limit_bytes=32 * 1024 * 1024),
    )(x1col, w1f, b1, w2f, b2)

    # Back to NCHW to match the PyTorch module's output layout.
    # TODO(synk): fold this transpose into the consumer in a real model.
    return jnp.transpose(out, (0, 3, 1, 2))


# ------------------------------ Parameters --------------------------------- #

class StemParams:
    """Deterministic parameter init mirroring the PyTorch module shapes.
    BatchNorm (inference form) is folded into per-channel (scale, bias)."""

    def __init__(self, key, img_channels, dim, eps=1e-5):
        k1, k2 = jax.random.split(key)
        self.w1 = (jax.random.normal(k1, (3, 3, img_channels, dim),
                                     jnp.float32) * 0.1)
        self.w2 = (jax.random.normal(k2, (3, 3, dim, dim), jnp.float32) * 0.1)
        gamma = jnp.ones((dim,), jnp.float32)
        beta = jnp.zeros((dim,), jnp.float32)
        mean = jnp.zeros((dim,), jnp.float32)
        var = jnp.ones((dim,), jnp.float32)
        self.scale1 = gamma / jnp.sqrt(var + eps)
        self.bias1 = beta - mean * self.scale1
        self.scale2 = gamma / jnp.sqrt(var + eps)
        self.bias2 = beta - mean * self.scale2


# ------------------------------ Reference ---------------------------------- #

def _reference_forward(x_nchw, params):
    """Pure-JAX reference mirroring the kernel's bf16 operand rounding
    (products in f32), so the comparison is tight."""
    f32 = jnp.float32

    def block(x, w, scale, bias, stride):
        wf = (w * scale).astype(jnp.bfloat16).astype(f32)
        xb = x.astype(jnp.bfloat16).astype(f32)
        y = lax.conv_general_dilated(
            xb, wf, window_strides=(stride, stride),
            padding=((1, 1), (1, 1)),
            dimension_numbers=("NCHW", "HWIO", "NCHW"),
            precision=lax.Precision.HIGHEST)
        y = y + bias[None, :, None, None]
        return jnp.maximum(y, 0.0)

    y = block(x_nchw, params.w1, params.scale1, params.bias1, 2)
    y = block(y, params.w2, params.scale2, params.bias2, 1)
    return y


# --------------------------------- Main ------------------------------------ #

if __name__ == "__main__":
    key = jax.random.PRNGKey(0)
    k_x, k_p = jax.random.split(key)

    # cfg.img_channels=4, cfg.dim=32; input [N=2, C=4, H=16, W=16] (NCHW).
    N, C_IMG, H, W, DIM = 2, 4, 16, 16, 32
    x = jax.random.normal(k_x, (N, C_IMG, H, W), jnp.float32)
    params = StemParams(k_p, C_IMG, DIM)

    out = stem_forward(x, params.w1, params.scale1, params.bias1,
                       params.w2, params.scale2, params.bias2)
    out = jax.block_until_ready(out)

    assert out.shape == (N, DIM, H // 2, W // 2), out.shape

    ref = jax.block_until_ready(_reference_forward(x, params))
    max_err = float(jnp.max(jnp.abs(out - ref)))
    assert jnp.allclose(out, ref, atol=5e-3, rtol=5e-3), max_err

    print("KERNEL_OK")
</pallas_src>

<mosaic_0001>
module attributes {stable_mosaic.version = 11 : i64} {
  func.func @_stem_kernel(%arg0: i32, %arg1: memref<1x64x36xbf16, #tpu.memory_space<vmem>>, %arg2: memref<36x32xbf16, #tpu.memory_space<vmem>>, %arg3: memref<1x32xf32, #tpu.memory_space<vmem>>, %arg4: memref<288x32xbf16, #tpu.memory_space<vmem>>, %arg5: memref<1x32xf32, #tpu.memory_space<vmem>>, %arg6: memref<1x8x8x32xf32, #tpu.memory_space<vmem>>) attributes {dimension_semantics = [#tpu.dimension_semantics<parallel>], iteration_bounds = array<i64: 2>, scalar_prefetch = 0 : i64, scratch_operands = 0 : i64, tpu.core_type = #tpu.core_type<tc>, window_params = [{transform_indices = @transform_0, window_bounds = array<i64: 1, 64, 36>}, {pipeline_mode = #tpu.pipeline_mode<synchronous>, transform_indices = @transform_1, window_bounds = array<i64: 36, 32>}, {pipeline_mode = #tpu.pipeline_mode<synchronous>, transform_indices = @transform_2, window_bounds = array<i64: 1, 32>}, {pipeline_mode = #tpu.pipeline_mode<synchronous>, transform_indices = @transform_3, window_bounds = array<i64: 288, 32>}, {pipeline_mode = #tpu.pipeline_mode<synchronous>, transform_indices = @transform_4, window_bounds = array<i64: 1, 32>}, {transform_indices = @transform_5, window_bounds = array<i64: 1, 8, 8, 32>}]} {
    %c0 = arith.constant 0 : index
    %c0_0 = arith.constant 0 : index
    %c0_1 = arith.constant 0 : index
    %0 = vector.load %arg1[%c0, %c0_0, %c0_1] : memref<1x64x36xbf16, #tpu.memory_space<vmem>>, vector<1x64x36xbf16>
    %1 = vector.shape_cast %0 : vector<1x64x36xbf16> to vector<64x36xbf16>
    %c0_2 = arith.constant 0 : index
    %c0_3 = arith.constant 0 : index
    %2 = vector.load %arg2[%c0_2, %c0_3] : memref<36x32xbf16, #tpu.memory_space<vmem>>, vector<36x32xbf16>
    %cst = arith.constant dense<0.000000e+00> : vector<64x32xf32>
    %3 = tpu.matmul %1, %2, %cst {dimension_numbers = #tpu.dot_dimension_numbers<[1], [0], [0], [1], [0, 0, 1, 1], [], []>} : vector<64x36xbf16>, vector<36x32xbf16>, vector<64x32xf32> -> vector<64x32xf32>
    %c0_4 = arith.constant 0 : index
    %c0_5 = arith.constant 0 : index
    %4 = vector.load %arg3[%c0_4, %c0_5] : memref<1x32xf32, #tpu.memory_space<vmem>>, vector<1x32xf32>
    %5 = vector.broadcast %4 : vector<1x32xf32> to vector<64x32xf32>
    %6 = arith.addf %3, %5 : vector<64x32xf32>
    %cst_6 = arith.constant 0.000000e+00 : f32
    %7 = vector.broadcast %cst_6 : f32 to vector<64x32xf32>
    %8 = arith.maximumf %6, %7 : vector<64x32xf32>
    %9 = arith.truncf %8 : vector<64x32xf32> to vector<64x32xbf16>
    %10 = vector.shape_cast %9 : vector<64x32xbf16> to vector<1x8x8x32xbf16>
    %cst_7 = arith.constant 0.000000e+00 : bf16
    %11 = vector.broadcast %cst_7 : bf16 to vector<1x1x8x32xbf16>
    %12 = tpu.concatenate %11, %10, %11 in 1 : vector<1x1x8x32xbf16>, vector<1x8x8x32xbf16>, vector<1x1x8x32xbf16> -> vector<1x10x8x32xbf16>
    %cst_8 = arith.constant 0.000000e+00 : bf16
    %13 = vector.broadcast %cst_8 : bf16 to vector<1x10x1x32xbf16>
    %14 = tpu.concatenate %13, %12, %13 in 2 : vector<1x10x1x32xbf16>, vector<1x10x8x32xbf16>, vector<1x10x1x32xbf16> -> vector<1x10x10x32xbf16>
    %15 = vector.extract_strided_slice %14 {offsets = [0, 0, 0, 0], sizes = [1, 8, 8, 32], strides = [1, 1, 1, 1]} : vector<1x10x10x32xbf16> to vector<1x8x8x32xbf16>
    %16 = vector.shape_cast %15 : vector<1x8x8x32xbf16> to vector<64x32xbf16>
    %17 = vector.extract_strided_slice %14 {offsets = [0, 0, 1, 0], sizes = [1, 8, 8, 32], strides = [1, 1, 1, 1]} : vector<1x10x10x32xbf16> to vector<1x8x8x32xbf16>
    %18 = vector.shape_cast %17 : vector<1x8x8x32xbf16> to vector<64x32xbf16>
    %19 = vector.extract_strided_slice %14 {offsets = [0, 0, 2, 0], sizes = [1, 8, 8, 32], strides = [1, 1, 1, 1]} : vector<1x10x10x32xbf16> to vector<1x8x8x32xbf16>
    %20 = vector.shape_cast %19 : vector<1x8x8x32xbf16> to vector<64x32xbf16>
    %21 = vector.extract_strided_slice %14 {offsets = [0, 1, 0, 0], sizes = [1, 8, 8, 32], strides = [1, 1, 1, 1]} : vector<1x10x10x32xbf16> to vector<1x8x8x32xbf16>
    %22 = vector.shape_cast %21 : vector<1x8x8x32xbf16> to vector<64x32xbf16>
    %23 = vector.extract_strided_slice %14 {offsets = [0, 1, 1, 0], sizes = [1, 8, 8, 32], strides = [1, 1, 1, 1]} : vector<1x10x10x32xbf16> to vector<1x8x8x32xbf16>
    %24 = vector.shape_cast %23 : vector<1x8x8x32xbf16> to vector<64x32xbf16>
    %25 = vector.extract_strided_slice %14 {offsets = [0, 1, 2, 0], sizes = [1, 8, 8, 32], strides = [1, 1, 1, 1]} : vector<1x10x10x32xbf16> to vector<1x8x8x32xbf16>
    %26 = vector.shape_cast %25 : vector<1x8x8x32xbf16> to vector<64x32xbf16>
    %27 = vector.extract_strided_slice %14 {offsets = [0, 2, 0, 0], sizes = [1, 8, 8, 32], strides = [1, 1, 1, 1]} : vector<1x10x10x32xbf16> to vector<1x8x8x32xbf16>
    %28 = vector.shape_cast %27 : vector<1x8x8x32xbf16> to vector<64x32xbf16>
    %29 = vector.extract_strided_slice %14 {offsets = [0, 2, 1, 0], sizes = [1, 8, 8, 32], strides = [1, 1, 1, 1]} : vector<1x10x10x32xbf16> to vector<1x8x8x32xbf16>
    %30 = vector.shape_cast %29 : vector<1x8x8x32xbf16> to vector<64x32xbf16>
    %31 = vector.extract_strided_slice %14 {offsets = [0, 2, 2, 0], sizes = [1, 8, 8, 32], strides = [1, 1, 1, 1]} : vector<1x10x10x32xbf16> to vector<1x8x8x32xbf16>
    %32 = vector.shape_cast %31 : vector<1x8x8x32xbf16> to vector<64x32xbf16>
    %33 = tpu.concatenate %16, %18, %20, %22, %24, %26, %28, %30, %32 in 1 : vector<64x32xbf16>, vector<64x32xbf16>, vector<64x32xbf16>, vector<64x32xbf16>, vector<64x32xbf16>, vector<64x32xbf16>, vector<64x32xbf16>, vector<64x32xbf16>, vector<64x32xbf16> -> vector<64x288xbf16>
    %c0_9 = arith.constant 0 : index
    %c0_10 = arith.constant 0 : index
    %34 = vector.load %arg4[%c0_9, %c0_10] : memref<288x32xbf16, #tpu.memory_space<vmem>>, vector<288x32xbf16>
    %cst_11 = arith.constant dense<0.000000e+00> : vector<64x32xf32>
    %35 = tpu.matmul %33, %34, %cst_11 {dimension_numbers = #tpu.dot_dimension_numbers<[1], [0], [0], [1], [0, 0, 1, 1], [], []>} : vector<64x288xbf16>, vector<288x32xbf16>, vector<64x32xf32> -> vector<64x32xf32>
    %c0_12 = arith.constant 0 : index
    %c0_13 = arith.constant 0 : index
    %36 = vector.load %arg5[%c0_12, %c0_13] : memref<1x32xf32, #tpu.memory_space<vmem>>, vector<1x32xf32>
    %37 = vector.broadcast %36 : vector<1x32xf32> to vector<64x32xf32>
    %38 = arith.addf %35, %37 : vector<64x32xf32>
    %cst_14 = arith.constant 0.000000e+00 : f32
    %39 = vector.broadcast %cst_14 : f32 to vector<64x32xf32>
    %40 = arith.maximumf %38, %39 : vector<64x32xf32>
    %41 = vector.shape_cast %40 : vector<64x32xf32> to vector<1x8x8x32xf32>
    %c0_15 = arith.constant 0 : index
    %c0_16 = arith.constant 0 : index
    %c0_17 = arith.constant 0 : index
    %c0_18 = arith.constant 0 : index
    %42 = vector.load %arg6[%c0_15, %c0_16, %c0_17, %c0_18] : memref<1x8x8x32xf32, #tpu.memory_space<vmem>>, vector<1x8x8x32xf32>
    tpu.vector_store %arg6[%c0_15, %c0_16, %c0_17, %c0_18], %41 {strides = array<i32>} : memref<1x8x8x32xf32, #tpu.memory_space<vmem>>, vector<1x8x8x32xf32>,
    return
  }
  func.func @transform_0(%arg0: i32) -> (i32, i32, i32) {
    %c0_i32 = arith.constant 0 : i32
    %c0_i32_0 = arith.constant 0 : i32
    %c0_i32_1 = arith.constant 0 : i32
    return %arg0, %c0_i32, %c0_i32_0 : i32, i32, i32
  }
  func.func @transform_1(%arg0: i32) -> (i32, i32) {
    %c0_i32 = arith.constant 0 : i32
    %c0_i32_0 = arith.constant 0 : i32
    %c0_i32_1 = arith.constant 0 : i32
    return %c0_i32, %c0_i32_0 : i32, i32
  }
  func.func @transform_2(%arg0: i32) -> (i32, i32) {
    %c0_i32 = arith.constant 0 : i32
    %c0_i32_0 = arith.constant 0 : i32
    %c0_i32_1 = arith.constant 0 : i32
    return %c0_i32, %c0_i32_0 : i32, i32
  }
  func.func @transform_3(%arg0: i32) -> (i32, i32) {
    %c0_i32 = arith.constant 0 : i32
    %c0_i32_0 = arith.constant 0 : i32
    %c0_i32_1 = arith.constant 0 : i32
    return %c0_i32, %c0_i32_0 : i32, i32
  }
  func.func @transform_4(%arg0: i32) -> (i32, i32) {
    %c0_i32 = arith.constant 0 : i32
    %c0_i32_0 = arith.constant 0 : i32
    %c0_i32_1 = arith.constant 0 : i32
    return %c0_i32, %c0_i32_0 : i32, i32
  }
  func.func @transform_5(%arg0: i32) -> (i32, i32, i32, i32) {
    %c0_i32 = arith.constant 0 : i32
    %c0_i32_0 = arith.constant 0 : i32
    %c0_i32_1 = arith.constant 0 : i32
    %c0_i32_2 = arith.constant 0 : i32
    return %arg0, %c0_i32, %c0_i32_0, %c0_i32_1 : i32, i32, i32, i32
  }
}

</mosaic_0001>

<llo_original>
// kernel: stem_forward.1
$region0: #{stem_forward.1}
  #allocation0 [shape = 'u32[]', space=smem, size = 0x4, offset = 0x4, fixed_abs, tag = 'smem constant byte address 0x4 - core index']
  #allocation1 [shape = 'u32[144,128]{1,0:T(1,128)}', space=vmem, size = 0x12000, scoped, tag = 'internal scratch']
  %s0 = inlined_call_operand.vmem [shape: bf16[2,64,36], index: 0, kind: input, shape index: {}]
  %s1 = inlined_call_operand.vmem [shape: bf16[36,32], index: 1, kind: input, shape index: {}]
  %s2 = inlined_call_operand.vmem [shape: f32[1,32], index: 2, kind: input, shape index: {}]
  %s3 = inlined_call_operand.vmem [shape: bf16[288,32], index: 3, kind: input, shape index: {}]
  %s4 = inlined_call_operand.vmem [shape: f32[1,32], index: 4, kind: input, shape index: {}]
  %s5 = inlined_call_operand.hbm [shape: f32[2,8,8,32], index: 5, kind: output, shape index: {}]
  %s6 = sld [smem:[#allocation0]]
  $region53: #{stem_forward.1} parent=0
    _
  %s8 = ssub.s32 1, %s6
  %s9 = scalar_select 0, %s8, %s6
  $region1: #{stem_forward.1} parent=0
    #allocation2 [shape = 'u8[65536]{0}', space=vmem, size = 0x10000, scoped, tag = 'output window, operand 0']
    #allocation3 [shape = 's32[2]{0}', space=sflag, size = 0x8, scoped, tag = 'scoped memory for stem_forward.1']
    %10 = vsyncpa [#allocation3], 0
    %s11 = scalar_lea.sflag [#allocation3], 1
    %12 = vsyncpa %s11, 0
    loop: start=0, step=1, limit=4
    $region2: #{stem_forward.1} parent=1 // loop_pre_header
      _
    $region3: #{stem_forward.1} parent=1 // loop_header
      %s14 = sphi 0, %s18
      %p15 = scmp.ge.s32.totalorder %s14, 4
      %s24 = sphi 0, %s26
      %s27 = sphi 0, %s24
      %s28 = sphi 0, %s27
      %s44 = sphi 0, %s28
      %s48 = sphi 0, %s48
      %s50 = sphi 0, %s48
      %s51 = sphi 0, %s50
      %s65 = sphi 0, %s51
      %s69 = sphi 0, %s69
      %s71 = sphi 0, %s69
      %s72 = sphi 0, %s71
      %s86 = sphi 0, %s72
      %s90 = sphi 0, %s90
      %s92 = sphi 0, %s90
      %s93 = sphi 0, %s92
      %s107 = sphi 0, %s93
      %s111 = sphi 0, %s111
      %s113 = sphi 0, %s111
      %s114 = sphi 0, %s113
      %s128 = sphi 0, %s114
      %s134 = sphi 0, %s136
      %s137 = sphi 0, %s134
      %s138 = sphi 0, %s137
      %s154 = sphi 0, %s138
    $region4: #{stem_forward.1} parent=1 // loop_header_branch
      %17 = sbr.rel (%p15) target = $region8
    $region5: #{stem_forward.1} parent=1 // loop_body
      %s19 = ssub.s32 %s14, 1
      %s20 = ssub.s32 %s14, 2
      %s21 = sadd.s32 %s14, 1
      %s22 = ssub.s32 %s14, %s21
      %p23 = scmp.eq.s32.totalorder %s22, 0
      %s25 = sadd.s32 %s24, 1
      %s26 = scalar_select %p23, %s24, %s25
      %p29 = pneg %p23
      %p30 = scmp.eq.s32.totalorder %s14, 1
      %p31 = por %p29, %p30
      %p32 = scmp.ne.s32.totalorder %s24, %s27
      %p33 = scmp.eq.s32.totalorder %s14, 0
      %p34 = por %p32, %p33
      %p35 = scmp.ne.s32.totalorder %s24, %s27
      %p36 = scmp.eq.s32.totalorder %s19, 1
      %p37 = por %p35, %p36
      %p38 = scmp.ne.s32.totalorder %s27, %s28
      %p39 = scmp.eq.s32.totalorder %s19, 0
      %p40 = por %p38, %p39
      %p41 = scmp.ne.s32.totalorder %s27, %s28
      %p42 = scmp.eq.s32.totalorder %s20, 1
      %p43 = por %p41, %p42
      %p45 = scmp.ne.s32.totalorder %s28, %s44
      %p46 = scmp.eq.s32.totalorder %s20, 0
      %p47 = por %p45, %p46
      %s49 = sadd.s32 %s48, 1
      %p52 = scmp.eq.s32.totalorder %s14, 1
      %p53 = scmp.ne.s32.totalorder %s48, %s50
      %p54 = scmp.eq.s32.totalorder %s14, 0
      %p55 = por %p53, %p54
      %p56 = scmp.ne.s32.totalorder %s48, %s50
      %p57 = scmp.eq.s32.totalorder %s19, 1
      %p58 = por %p56, %p57
      %p59 = scmp.ne.s32.totalorder %s50, %s51
      %p60 = scmp.eq.s32.totalorder %s19, 0
      %p61 = por %p59, %p60
      %p62 = scmp.ne.s32.totalorder %s50, %s51
      %p63 = scmp.eq.s32.totalorder %s20, 1
      %p64 = por %p62, %p63
      %p66 = scmp.ne.s32.totalorder %s51, %s65
      %p67 = scmp.eq.s32.totalorder %s20, 0
      %p68 = por %p66, %p67
      %s70 = sadd.s32 %s69, 1
      %p73 = scmp.eq.s32.totalorder %s14, 1
      %p74 = scmp.ne.s32.totalorder %s69, %s71
      %p75 = scmp.eq.s32.totalorder %s14, 0
      %p76 = por %p74, %p75
      %p77 = scmp.ne.s32.totalorder %s69, %s71
      %p78 = scmp.eq.s32.totalorder %s19, 1
      %p79 = por %p77, %p78
      %p80 = scmp.ne.s32.totalorder %s71, %s72
      %p81 = scmp.eq.s32.totalorder %s19, 0
      %p82 = por %p80, %p81
      %p83 = scmp.ne.s32.totalorder %s71, %s72
      %p84 = scmp.eq.s32.totalorder %s20, 1
      %p85 = por %p83, %p84
      %p87 = scmp.ne.s32.totalorder %s72, %s86
      %p88 = scmp.eq.s32.totalorder %s20, 0
      %p89 = por %p87, %p88
      %s91 = sadd.s32 %s90, 1
      %p94 = scmp.eq.s32.totalorder %s14, 1
      %p95 = scmp.ne.s32.totalorder %s90, %s92
      %p96 = scmp.eq.s32.totalorder %s14, 0
      %p97 = por %p95, %p96
      %p98 = scmp.ne.s32.totalorder %s90, %s92
      %p99 = scmp.eq.s32.totalorder %s19, 1
      %p100 = por %p98, %p99
      %p101 = scmp.ne.s32.totalorder %s92, %s93
      %p102 = scmp.eq.s32.totalorder %s19, 0
      %p103 = por %p101, %p102
      %p104 = scmp.ne.s32.totalorder %s92, %s93
      %p105 = scmp.eq.s32.totalorder %s20, 1
      %p106 = por %p104, %p105
      %p108 = scmp.ne.s32.totalorder %s93, %s107
      %p109 = scmp.eq.s32.totalorder %s20, 0
      %p110 = por %p108, %p109
      %s112 = sadd.s32 %s111, 1
      %p115 = scmp.eq.s32.totalorder %s14, 1
      %p116 = scmp.ne.s32.totalorder %s111, %s113
      %p117 = scmp.eq.s32.totalorder %s14, 0
      %p118 = por %p116, %p117
      %p119 = scmp.ne.s32.totalorder %s111, %s113
      %p120 = scmp.eq.s32.totalorder %s19, 1
      %p121 = por %p119, %p120
      %p122 = scmp.ne.s32.totalorder %s113, %s114
      %p123 = scmp.eq.s32.totalorder %s19, 0
      %p124 = por %p122, %p123
      %p125 = scmp.ne.s32.totalorder %s113, %s114
      %p126 = scmp.eq.s32.totalorder %s20, 1
      %p127 = por %p125, %p126
      %p129 = scmp.ne.s32.totalorder %s114, %s128
      %p130 = scmp.eq.s32.totalorder %s20, 0
      %p131 = por %p129, %p130
      %s132 = ssub.s32 %s14, %s21
      %p133 = scmp.eq.s32.totalorder %s132, 0
      %s135 = sadd.s32 %s134, 1
      %s136 = scalar_select %p133, %s134, %s135
      %p139 = pneg %p133
      %p140 = scmp.eq.s32.totalorder %s14, 1
      %p141 = por %p139, %p140
      %p142 = scmp.ne.s32.totalorder %s134, %s137
      %p143 = scmp.eq.s32.totalorder %s14, 0
      %p144 = por %p142, %p143
      %p145 = scmp.ne.s32.totalorder %s134, %s137
      %p146 = scmp.eq.s32.totalorder %s19, 1
      %p147 = por %p145, %p146
      %p148 = scmp.ne.s32.totalorder %s137, %s138
      %p149 = scmp.eq.s32.totalorder %s19, 0
      %p150 = por %p148, %p149
      %p151 = scmp.ne.s32.totalorder %s137, %s138
      %p152 = scmp.eq.s32.totalorder %s20, 1
      %p153 = por %p151, %p152
      %p155 = scmp.ne.s32.totalorder %s138, %s154
      %p156 = scmp.eq.s32.totalorder %s20, 0
      %p157 = por %p155, %p156
      %p158 = scmp.le.s32.totalorder 1, %s14
      %p159 = scmp.lt.s32.totalorder %s14, 3
      %p160 = pnand %p158, %p159
      %p161 = pneg %p160
      // Predicated region
      $region9: #{stem_forward.1} parent=5 // pred_check
        _
      $region10: #{stem_forward.1} parent=5 // pred_check_branch
        %163 = sbr.rel (%p160) target = $region12
      $region11: #{stem_forward.1} parent=5 // pred_region
        %s164 = ssub.s32 %s14, 1
        // Predicated region
        $region13: #{stem_forward.1} parent=11 // pred_check
          %p165 = pneg %p61
        $region14: #{stem_forward.1} parent=11 // pred_check_branch
          %167 = sbr.rel (%p165) target = $region16
        $region15: #{stem_forward.1} parent=11 // pred_region
          _
        $region16: #{stem_forward.1} parent=11 // pred_fallthru
          _
        // Predicated region
        $region17: #{stem_forward.1} parent=11 // pred_check
          %p168 = pneg %p82
        $region18: #{stem_forward.1} parent=11 // pred_check_branch
          %170 = sbr.rel (%p168) target = $region20
        $region19: #{stem_forward.1} parent=11 // pred_region
          _
        $region20: #{stem_forward.1} parent=11 // pred_fallthru
          _
        // Predicated region
        $region21: #{stem_forward.1} parent=11 // pred_check
          %p171 = pneg %p103
        $region22: #{stem_forward.1} parent=11 // pred_check_branch
          %173 = sbr.rel (%p171) target = $region24
        $region23: #{stem_forward.1} parent=11 // pred_region
          _
        $region24: #{stem_forward.1} parent=11 // pred_fallthru
          _
        // Predicated region
        $region25: #{stem_forward.1} parent=11 // pred_check
          %p174 = pneg %p124
        $region26: #{stem_forward.1} parent=11 // pred_check_branch
          %176 = sbr.rel (%p174) target = $region28
        $region27: #{stem_forward.1} parent=11 // pred_region
          _
        $region28: #{stem_forward.1} parent=11 // pred_fallthru
          _
      $region12: #{stem_forward.1} parent=5 // pred_fallthru
        _
      %p177 = scmp.lt.s32.totalorder %s14, 2
      // Predicated region
      $region29: #{stem_forward.1} parent=5 // pred_check
        %p178 = pneg %p177
      $region30: #{stem_forward.1} parent=5 // pred_check_branch
        %180 = sbr.rel (%p178) target = $region32
      $region31: #{stem_forward.1} parent=5 // pred_region
        // Predicated region
        $region33: #{stem_forward.1} parent=31 // pred_check
          %p181 = pneg %p34
        $region34: #{stem_forward.1} parent=31 // pred_check_branch
          %183 = sbr.rel (%p181) target = $region36
        $region35: #{stem_forward.1} parent=31 // pred_region
          %p184 = scmp.lt.s32.totalorder %s14, 1
          %s185 = scalar_select %p184, %s14, 1
          %s186 = smul.addr %s185, 8
          %s187 = smul.addr %s186, 4
          %s188 = scalar_lea.vmem %s0, %s187
        $region36: #{stem_forward.1} parent=31 // pred_fallthru
          _
      $region32: #{stem_forward.1} parent=5 // pred_fallthru
        _
      %p189 = scmp.le.s32.totalorder 1, %s14
      %p190 = scmp.lt.s32.totalorder %s14, 3
      %p191 = pnand %p189, %p190
      %p192 = pneg %p191
      // Predicated region
      $region37: #{stem_forward.1} parent=5 // pred_check
        _
      $region38: #{stem_forward.1} parent=5 // pred_check_branch
        %194 = sbr.rel (%p191) target = $region40
      $region39: #{stem_forward.1} parent=5 // pred_region
        %s195 = ssub.s32 %s14, 1
        %p196 = scmp.lt.s32.totalorder %s19, 1
        %s197 = scalar_select %p196, %s19, 1
        %s198 = smul.addr %s197, 8
        %s199 = smul.addr %s198, 4
        %s200 = scalar_lea.vmem %s0, %s199
        %p201 = pneg %p40
        %p202 = pneg %p37
        %p203 = pneg %p61
        %p204 = pneg %p58
        %p205 = pneg %p82
        %p206 = pneg %p79
        %p207 = pneg %p103
        %p208 = pneg %p100
        %p209 = pneg %p124
        %p210 = pneg %p121
        %p211 = pneg %p150
        %p212 = pneg %p147
        %s213 = sand.u32 %s137, 1
        %s214 = scalar_lea.sflag [#allocation3], %s213
        %s215 = sand.u32 %s137, 1
        %s216 = smul.addr %s215, 64
        %s217 = scalar_lea.vmem [#allocation2], %s216
        %p218 = scmp.lt.s32.totalorder %s19, 1
        %s219 = scalar_select %p218, %s19, 1
        %s220 = smul.addr %s219, 8
        %s221 = smul.addr %s220, 4
        %s222 = scalar_lea.vmem %s0, %s221
        %v224 = vld [vmem:[%s222] sm:$0xf]
        %v225 = vld [vmem:[%s222 + $0x4] sm:$0xf]
        %v226 = vld [vmem:[%s222 + $0x8] sm:$0xf]
        %v227 = vld [vmem:[%s222 + $0xc] sm:$0xf]
        %v228 = vld [vmem:[%s222 + $0x10] sm:$0xf]
        %v229 = vld [vmem:[%s222 + $0x14] sm:$0xf]
        %v230 = vld [vmem:[%s222 + $0x18] sm:$0xf]
        %v231 = vld [vmem:[%s222 + $0x1c] sm:$0xf]
        %v232 = vld [vmem:[%s1] sm:$0xf]
        %v233 = vld [vmem:[%s1 + $0x4] sm:$0xf]
        %v234 = vld [vmem:[%s1 + $0x8] sm:$0xf]
        %v235 = vld [vmem:[%s1 + $0xc] sm:$0xf]
        %v236 = vld [vmem:[%s1 + $0x10] sm:$0x3]
        %v237 = vld [vmem:[%s2] sm:$0x1]
        %v239 = vlaneseq
        %v240 = vshrl.u32 %v239, 7
        %v241 = vsub.s32 0, %v240
        %v242 = vrot.slane %v237, %v241
        %v252 = vunpack.c.l.b16 %v224
        %v253 = vunpack.c.l.b16 %v225
        %v254 = vunpack.c.l.b16 %v226
        %v255 = vunpack.c.l.b16 %v227
        %v256 = vunpack.c.l.b16 %v228
        %v257 = vunpack.c.l.b16 %v229
        %v258 = vunpack.c.l.b16 %v230
        %v259 = vunpack.c.l.b16 %v231
        %v260 = vpack.c.b16 %v253, %v252
        %v261 = vpack.c.b16 %v255, %v254
        %v262 = vpack.c.b16 %v257, %v256
        %v263 = vpack.c.b16 %v259, %v258
        %v269 = vunpack.c.l.b16 %v232
        %v270 = vunpack.c.l.b16 %v233
        %v271 = vunpack.c.l.b16 %v234
        %v272 = vunpack.c.l.b16 %v235
        %v273 = vunpack.c.l.b16 %v236
        %v274 = vpack.c.b16 %v270, %v269
        %v275 = vpack.c.b16 %v272, %v271
        %v276 = vpack.c.b16 %v273, %v273
        %vm279 = vcmask 293888
        %v281 = vsel %vm279, %v260, 0
        %v284 = vsel %vm279, %v261, 0
        %v287 = vsel %vm279, %v262, 0
        %v290 = vsel %vm279, %v263, 0
        %vm292 = vcmask 1041408
        %v294 = vsel %vm292, %v276, 0
        %296 = vmatprep.subr.bf16.mxu0 0
        %297 = vmatpush1.bf16.msra.mxu0 %v274
        %298 = vmatprep.subr.bf16.mxu0 0
        %299 = vmatpush1.bf16.msra.mxu0 %v275
        %300 = vmatprep.subr.bf16.mxu0 0
        %301 = vmatpush1.bf16.msra.mxu0 %v294
        %302 = vmatprep.subr.bf16.mxu0 0
        %303 = vmatpush1.bf16.msra.mxu0 0
        %304 = vmatprep.subr.bf16.mxu0 0
        %305 = vmatpush1.bf16.msra.mxu0 0
        %306 = vmatprep.subr.bf16.mxu0 0
        %307 = vmatpush1.bf16.msra.mxu0 0
        %308 = vmatprep.subr.bf16.mxu0 0
        %309 = vmatpush1.bf16.msra.mxu0 0
        %310 = vmatprep.subr.bf16.mxu0 0
        %311 = vmatpush1.bf16.msra.mxu0 0
        %312 = vmatprep.subr.bf16.mxu0 0
        %313 = vmatpush1.bf16.msra.mxu0 0
        %314 = vmatprep.subr.bf16.mxu0 0
        %315 = vmatpush1.bf16.msra.mxu0 0
        %316 = vmatprep.subr.bf16.mxu0 0
        %317 = vmatpush1.bf16.msra.mxu0 0
        %318 = vmatprep.subr.bf16.mxu0 0
        %319 = vmatpush1.bf16.msra.mxu0 0
        %320 = vmatprep.subr.bf16.mxu0 0
        %321 = vmatpush1.bf16.msra.mxu0 0
        %322 = vmatprep.subr.bf16.mxu0 0
        %323 = vmatpush1.bf16.msra.mxu0 0
        %324 = vmatprep.subr.bf16.mxu0 0
        %325 = vmatpush1.bf16.msra.mxu0 0
        %326 = vmatprep.subr.bf16.mxu0 0
        %327 = vmatpush1.bf16.msra.mxu0 0
        %328 = vmatprep.mubr.bf16.mxu0 0
        %329 = vmatmul.mubr.bf16.gmra.mrb[0].mxu0 %v281
        %v330 = vpop.f32.mrb[0].mxu0
        %v331 = vadd.f32 %v242, %v330
        %v332 = vpop.f32.mrb[0].mxu0
        %v333 = vpop.f32.mrb[0].mxu0
        %v334 = vadd.f32 %v242, %v333
        %v335 = vpop.f32.mrb[0].mxu0
        %336 = vmatprep.mubr.bf16.mxu0 0
        %337 = vmatmul.mubr.bf16.gmra.mrb[0].mxu0 %v284
        %v338 = vpop.f32.mrb[0].mxu0
        %v339 = vadd.f32 %v242, %v338
        %v340 = vpop.f32.mrb[0].mxu0
        %v341 = vpop.f32.mrb[0].mxu0
        %v342 = vadd.f32 %v242, %v341
        %v343 = vpop.f32.mrb[0].mxu0
        %344 = vmatprep.mubr.bf16.mxu0 0
        %345 = vmatmul.mubr.bf16.gmra.mrb[0].mxu0 %v287
        %v346 = vpop.f32.mrb[0].mxu0
        %v347 = vadd.f32 %v242, %v346
        %v348 = vpop.f32.mrb[0].mxu0
        %v349 = vpop.f32.mrb[0].mxu0
        %v350 = vadd.f32 %v242, %v349
        %v351 = vpop.f32.mrb[0].mxu0
        %352 = vmatprep.mubr.bf16.mxu0 0
        %353 = vmatmul.mubr.bf16.gmra.mrb[0].mxu0 %v290
        %v354 = vpop.f32.mrb[0].mxu0
        %v355 = vadd.f32 %v242, %v354
        %v356 = vpop.f32.mrb[0].mxu0
        %v357 = vpop.f32.mrb[0].mxu0
        %v358 = vadd.f32 %v242, %v357
        %v359 = vpop.f32.mrb[0].mxu0
        %360 = vdwg.mxu0
        %v361 = vmax.f32 %v331, 0.0
        %v362 = vmax.f32 %v334, 0.0
        %v363 = vmax.f32 %v339, 0.0
        %v364 = vmax.f32 %v342, 0.0
        %v365 = vmax.f32 %v347, 0.0
        %v366 = vmax.f32 %v350, 0.0
        %v367 = vmax.f32 %v355, 0.0
        %v368 = vmax.f32 %v358, 0.0
        %v369 = vpack.c.bf16 %v362, %v361
        %v370 = vpack.c.bf16 %v364, %v363
        %v371 = vpack.c.bf16 %v366, %v365
        %v372 = vpack.c.bf16 %v368, %v367
        %v377 = vunpack.c.l.b16 %v369
        %v378 = vunpack.c.h.b16 %v369
        %v379 = vunpack.c.l.b16 %v370
        %v380 = vunpack.c.h.b16 %v370
        %v381 = vunpack.c.l.b16 %v371
        %v382 = vunpack.c.h.b16 %v371
        %v383 = vunpack.c.l.b16 %v372
        %v384 = vunpack.c.h.b16 %v372
        %v385 = vpack.c.b16 %v377, %v377
        %v386 = vpack.c.b16 %v378, %v378
        %v387 = vpack.c.b16 %v379, %v379
        %v388 = vpack.c.b16 %v380, %v380
        %v389 = vpack.c.b16 %v381, %v381
        %v390 = vpack.c.b16 %v382, %v382
        %v391 = vpack.c.b16 %v383, %v383
        %v392 = vpack.c.b16 %v384, %v384
        %v394 = vshrl.u32 0, 16
        %v396 = vrot.slane %v394, 7
        %v397 = vshll.u32 0, 16
        %v399 = vor.u32 %v396, %v397
        %v401 = vshrl.u32 %v385, 16
        %v403 = vrot.slane %v401, 7
        %v404 = vshll.u32 %v385, 16
        %v406 = vor.u32 %v403, %v404
        %v408 = vshrl.u32 %v386, 16
        %v410 = vrot.slane %v408, 7
        %v411 = vshll.u32 %v386, 16
        %v413 = vor.u32 %v410, %v411
        %v415 = vshrl.u32 %v387, 16
        %v417 = vrot.slane %v415, 7
        %v418 = vshll.u32 %v387, 16
        %v420 = vor.u32 %v417, %v418
        %v422 = vshrl.u32 %v388, 16
        %v424 = vrot.slane %v422, 7
        %v425 = vshll.u32 %v388, 16
        %v427 = vor.u32 %v424, %v425
        %v429 = vshrl.u32 %v389, 16
        %v431 = vrot.slane %v429, 7
        %v432 = vshll.u32 %v389, 16
        %v434 = vor.u32 %v431, %v432
        %v436 = vshrl.u32 %v390, 16
        %v438 = vrot.slane %v436, 7
        %v439 = vshll.u32 %v390, 16
        %v441 = vor.u32 %v438, %v439
        %v443 = vshrl.u32 %v391, 16
        %v445 = vrot.slane %v443, 7
        %v446 = vshll.u32 %v391, 16
        %v448 = vor.u32 %v445, %v446
        %v450 = vshrl.u32 %v392, 16
        %v452 = vrot.slane %v450, 7
        %v453 = vshll.u32 %v392, 16
        %v455 = vor.u32 %v452, %v453
        %vm465 = vcmask 1040384
        %vm466 = vsmask.f32 256
        %vm467 = vmand %vm465, %vm466
        %v468 = vsel %vm467, 0, %v399
        %v469 = vsel %vm467, 0, %v406
        %v470 = vsel %vm467, 0, %v413
        %v471 = vsel %vm467, 0, %v420
        %v472 = vsel %vm467, 0, %v427
        %v473 = vsel %vm467, 0, %v434
        %v474 = vsel %vm467, 0, %v441
        %v475 = vsel %vm467, 0, %v448
        %v476 = vsel %vm467, 0, %v455
        %vm477 = vcmask 1044480
        %vm478 = vsmask.f32 4352
        %vm479 = vmand %vm477, %vm478
        %v480 = vsel %vm479, %v468, 0
        %v481 = vsel %vm479, %v469, 0
        %v482 = vsel %vm479, %v470, 0
        %v483 = vsel %vm479, %v471, 0
        %v484 = vsel %vm479, %v472, 0
        %v485 = vsel %vm479, %v473, 0
        %v486 = vsel %vm479, %v474, 0
        %v487 = vsel %vm479, %v475, 0
        %v488 = vsel %vm479, %v476, 0
        %v497 = vunpack.c.l.b16 %v480
        %v498 = vunpack.c.h.b16 %v480
        %v499 = vunpack.c.l.b16 %v481
        %v500 = vunpack.c.h.b16 %v481
        %v501 = vunpack.c.l.b16 %v482
        %v502 = vunpack.c.h.b16 %v482
        %v503 = vunpack.c.l.b16 %v483
        %v504 = vunpack.c.h.b16 %v483
        %v505 = vunpack.c.l.b16 %v484
        %v506 = vunpack.c.h.b16 %v484
        %v507 = vunpack.c.l.b16 %v485
        %v508 = vunpack.c.h.b16 %v485
        %v509 = vunpack.c.l.b16 %v486
        %v510 = vunpack.c.h.b16 %v486
        %v511 = vunpack.c.l.b16 %v487
        %v512 = vunpack.c.h.b16 %v487
        %v513 = vpack.c.b16 %v497, %v497
        %v514 = vpack.c.b16 %v498, %v498
        %v515 = vpack.c.b16 %v499, %v499
        %v516 = vpack.c.b16 %v500, %v500
        %v517 = vpack.c.b16 %v501, %v501
        %v518 = vpack.c.b16 %v502, %v502
        %v519 = vpack.c.b16 %v503, %v503
        %v520 = vpack.c.b16 %v504, %v504
        %v521 = vpack.c.b16 %v505, %v505
        %v522 = vpack.c.b16 %v506, %v506
        %v523 = vpack.c.b16 %v507, %v507
        %v524 = vpack.c.b16 %v508, %v508
        %v525 = vpack.c.b16 %v509, %v509
        %v526 = vpack.c.b16 %v510, %v510
        %v527 = vpack.c.b16 %v511, %v511
        %v528 = vpack.c.b16 %v512, %v512
        %vm529 = vsmask.f32 3328
        %vm530 = vsmask.f32 7440
        %vm531 = vmor %vm529, %vm530
        %v533 = vshrl.u32 %v513, 16
        %v535 = vrot.slane %v533, 4
        %v536 = vshll.u32 %v513, 16
        %v538 = vrot.slane %v536, 5
        %v539 = vor.u32 %v535, %v538
        %v540 = vrot.slane %v539, 4
        %v542 = vshll.u32 %v514, 16
        %v544 = vrot.slane %v542, 5
        %v545 = vsel %vm531, %v540, %v544
        %v547 = vshrl.u32 %v515, 16
        %v549 = vrot.slane %v547, 4
        %v550 = vshll.u32 %v515, 16
        %v552 = vrot.slane %v550, 5
        %v553 = vor.u32 %v549, %v552
        %v554 = vrot.slane %v553, 4
        %v556 = vshll.u32 %v516, 16
        %v558 = vrot.slane %v556, 5
        %v559 = vsel %vm531, %v554, %v558
        %v561 = vshrl.u32 %v517, 16
        %v563 = vrot.slane %v561, 4
        %v564 = vshll.u32 %v517, 16
        %v566 = vrot.slane %v564, 5
        %v567 = vor.u32 %v563, %v566
        %v568 = vrot.slane %v567, 4
        %v570 = vshll.u32 %v518, 16
        %v572 = vrot.slane %v570, 5
        %v573 = vsel %vm531, %v568, %v572
        %v575 = vshrl.u32 %v519, 16
        %v577 = vrot.slane %v575, 4
        %v578 = vshll.u32 %v519, 16
        %v580 = vrot.slane %v578, 5
        %v581 = vor.u32 %v577, %v580
        %v582 = vrot.slane %v581, 4
        %v584 = vshll.u32 %v520, 16
        %v586 = vrot.slane %v584, 5
        %v587 = vsel %vm531, %v582, %v586
        %v589 = vshrl.u32 %v521, 16
        %v591 = vrot.slane %v589, 4
        %v592 = vshll.u32 %v521, 16
        %v594 = vrot.slane %v592, 5
        %v595 = vor.u32 %v591, %v594
        %v596 = vrot.slane %v595, 4
        %v598 = vshll.u32 %v522, 16
        %v600 = vrot.slane %v598, 5
        %v601 = vsel %vm531, %v596, %v600
        %v603 = vshrl.u32 %v523, 16
        %v605 = vrot.slane %v603, 4
        %v606 = vshll.u32 %v523, 16
        %v608 = vrot.slane %v606, 5
        %v609 = vor.u32 %v605, %v608
        %v610 = vrot.slane %v609, 4
        %v612 = vshll.u32 %v524, 16
        %v614 = vrot.slane %v612, 5
        %v615 = vsel %vm531, %v610, %v614
        %v617 = vshrl.u32 %v525, 16
        %v619 = vrot.slane %v617, 4
        %v620 = vshll.u32 %v525, 16
        %v622 = vrot.slane %v620, 5
        %v623 = vor.u32 %v619, %v622
        %v624 = vrot.slane %v623, 4
        %v626 = vshll.u32 %v526, 16
        %v628 = vrot.slane %v626, 5
        %v629 = vsel %vm531, %v624, %v628
        %v631 = vshrl.u32 %v527, 16
        %v633 = vrot.slane %v631, 4
        %v634 = vshll.u32 %v527, 16
        %v636 = vrot.slane %v634, 5
        %v637 = vor.u32 %v633, %v636
        %v638 = vrot.slane %v637, 4
        %v640 = vshll.u32 %v528, 16
        %v642 = vrot.slane %v640, 5
        %v643 = vsel %vm531, %v638, %v642
        %vm644 = vcmask 1042432
        %vm645 = vcmask 1046532
        %vm646 = vmor %vm644, %vm645
        %v647 = vrot.slane %v513, 5
        %v648 = vrot.slane %v647, 4
        %v649 = vrot.slane %v514, 5
        %v650 = vsel %vm646, %v648, %v649
        %v651 = vrot.slane %v515, 5
        %v652 = vrot.slane %v651, 4
        %v653 = vrot.slane %v516, 5
        %v654 = vsel %vm646, %v652, %v653
        %v655 = vrot.slane %v517, 5
        %v656 = vrot.slane %v655, 4
        %v657 = vrot.slane %v518, 5
        %v658 = vsel %vm646, %v656, %v657
        %v659 = vrot.slane %v519, 5
        %v660 = vrot.slane %v659, 4
        %v661 = vrot.slane %v520, 5
        %v662 = vsel %vm646, %v660, %v661
        %v663 = vrot.slane %v521, 5
        %v664 = vrot.slane %v663, 4
        %v665 = vrot.slane %v522, 5
        %v666 = vsel %vm646, %v664, %v665
        %v667 = vrot.slane %v523, 5
        %v668 = vrot.slane %v667, 4
        %v669 = vrot.slane %v524, 5
        %v670 = vsel %vm646, %v668, %v669
        %v671 = vrot.slane %v525, 5
        %v672 = vrot.slane %v671, 4
        %v673 = vrot.slane %v526, 5
        %v674 = vsel %vm646, %v672, %v673
        %v675 = vrot.slane %v527, 5
        %v676 = vrot.slane %v675, 4
        %v677 = vrot.slane %v528, 5
        %v678 = vsel %vm646, %v676, %v677
        %v680 = vunpack.c.l.b16 %v488
        %v681 = vunpack.c.h.b16 %v488
        %v682 = vpack.c.b16 %v680, %v680
        %v683 = vpack.c.b16 %v681, %v681
        %v685 = vshrl.u32 %v682, 16
        %v687 = vrot.slane %v685, 4
        %v688 = vshll.u32 %v682, 16
        %v690 = vrot.slane %v688, 5
        %v691 = vor.u32 %v687, %v690
        %v692 = vrot.slane %v691, 4
        %v694 = vshll.u32 %v683, 16
        %v696 = vrot.slane %v694, 5
        %v697 = vsel %vm531, %v692, %v696
        %v698 = vrot.slane %v682, 5
        %v699 = vrot.slane %v698, 4
        %v700 = vrot.slane %v683, 5
        %v701 = vsel %vm646, %v699, %v700
        %v702 = vpack.c.b16 %v499, %v497
        %v703 = vpack.c.b16 %v503, %v501
        %v704 = vpack.c.b16 %v507, %v505
        %v705 = vpack.c.b16 %v511, %v509
        %v706 = vunpack.c.l.b16 %v545
        %v707 = vunpack.c.l.b16 %v559
        %v708 = vunpack.c.l.b16 %v573
        %v709 = vunpack.c.l.b16 %v587
        %v710 = vunpack.c.l.b16 %v601
        %v711 = vunpack.c.l.b16 %v615
        %v712 = vunpack.c.l.b16 %v629
        %v713 = vunpack.c.l.b16 %v643
        %v714 = vpack.c.b16 %v707, %v706
        %v715 = vpack.c.b16 %v709, %v708
        %v716 = vpack.c.b16 %v711, %v710
        %v717 = vpack.c.b16 %v713, %v712
        %718 = vrot.lane.b32.xlu0 %v714, 32
        %v719 = vpop.permute.xlu0 %718
        %720 = vrot.lane.b32.xlu0 %v715, 32
        %v721 = vpop.permute.xlu0 %720
        %722 = vrot.lane.b32.xlu0 %v716, 32
        %v723 = vpop.permute.xlu0 %722
        %724 = vrot.lane.b32.xlu0 %v717, 32
        %v725 = vpop.permute.xlu0 %724
        %v726 = vunpack.c.l.b16 %v650
        %v727 = vunpack.c.l.b16 %v654
        %v728 = vunpack.c.l.b16 %v658
        %v729 = vunpack.c.l.b16 %v662
        %v730 = vunpack.c.l.b16 %v666
        %v731 = vunpack.c.l.b16 %v670
        %v732 = vunpack.c.l.b16 %v674
        %v733 = vunpack.c.l.b16 %v678
        %v734 = vpack.c.b16 %v727, %v726
        %v735 = vpack.c.b16 %v729, %v728
        %v736 = vpack.c.b16 %v731, %v730
        %v737 = vpack.c.b16 %v733, %v732
        %738 = vrot.lane.b32.xlu0 %v734, 64
        %v739 = vpop.permute.xlu0 %738
        %740 = vrot.lane.b32.xlu0 %v735, 64
        %v741 = vpop.permute.xlu0 %740
        %742 = vrot.lane.b32.xlu0 %v736, 64
        %v743 = vpop.permute.xlu0 %742
        %744 = vrot.lane.b32.xlu0 %v737, 64
        %v745 = vpop.permute.xlu0 %744
        %v746 = vpack.c.b16 %v501, %v499
        %v747 = vpack.c.b16 %v505, %v503
        %v748 = vpack.c.b16 %v509, %v507
        %v749 = vpack.c.b16 %v680, %v511
        %750 = vrot.lane.b32.xlu0 %v746, 96
        %v751 = vpop.permute.xlu0 %750
        %752 = vrot.lane.b32.xlu0 %v747, 96
        %v753 = vpop.permute.xlu0 %752
        %754 = vrot.lane.b32.xlu0 %v748, 96
        %v755 = vpop.permute.xlu0 %754
        %756 = vrot.lane.b32.xlu0 %v749, 96
        %v757 = vpop.permute.xlu0 %756
        %v758 = vunpack.c.l.b16 %v697
        %v759 = vpack.c.b16 %v708, %v707
        %v760 = vpack.c.b16 %v710, %v709
        %v761 = vpack.c.b16 %v712, %v711
        %v762 = vpack.c.b16 %v758, %v713
        %v763 = vunpack.c.l.b16 %v701
        %v764 = vpack.c.b16 %v728, %v727
        %v765 = vpack.c.b16 %v730, %v729
        %v766 = vpack.c.b16 %v732, %v731
        %v767 = vpack.c.b16 %v763, %v733
        %768 = vrot.lane.b32.xlu0 %v764, 32
        %v769 = vpop.permute.xlu0 %768
        %770 = vrot.lane.b32.xlu0 %v765, 32
        %v771 = vpop.permute.xlu0 %770
        %772 = vrot.lane.b32.xlu0 %v766, 32
        %v773 = vpop.permute.xlu0 %772
        %774 = vrot.lane.b32.xlu0 %v767, 32
        %v775 = vpop.permute.xlu0 %774
        %v776 = vpack.c.b16 %v497, %v680
        %777 = vrot.lane.b32.xlu0 %v703, 64
        %v778 = vpop.permute.xlu0 %777
        %779 = vrot.lane.b32.xlu0 %v704, 64
        %v780 = vpop.permute.xlu0 %779
        %781 = vrot.lane.b32.xlu0 %v705, 64
        %v782 = vpop.permute.xlu0 %781
        %783 = vrot.lane.b32.xlu0 %v776, 64
        %v784 = vpop.permute.xlu0 %783
        %v785 = vpack.c.b16 %v706, %v758
        %786 = vrot.lane.b32.xlu0 %v715, 96
        %v787 = vpop.permute.xlu0 %786
        %788 = vrot.lane.b32.xlu0 %v716, 96
        %v789 = vpop.permute.xlu0 %788
        %790 = vrot.lane.b32.xlu0 %v717, 96
        %v791 = vpop.permute.xlu0 %790
        %792 = vrot.lane.b32.xlu0 %v785, 96
        %v793 = vpop.permute.xlu0 %792
        %v794 = vpack.c.b16 %v726, %v763
        %vm795 = vcmask 261120
        %v798 = vsel %vm795, %v702, %v719
        %v801 = vsel %vm795, %v703, %v721
        %v804 = vsel %vm795, %v704, %v723
        %v807 = vsel %vm795, %v705, %v725
        %vm808 = vcmask 523264
        %v810 = vsel %vm808, %v798, %v739
        %v812 = vsel %vm808, %v801, %v741
        %v814 = vsel %vm808, %v804, %v743
        %v816 = vsel %vm808, %v807, %v745
        %vm817 = vcmask 785408
        %v819 = vsel %vm817, %v810, %v751
        %v822 = vsel %vm817, %v812, %v753
        %v825 = vsel %vm817, %v814, %v755
        %v828 = vsel %vm817, %v816, %v757
        %v832 = vsel %vm795, %v759, %v769
        %v835 = vsel %vm795, %v760, %v771
        %v838 = vsel %vm795, %v761, %v773
        %v841 = vsel %vm795, %v762, %v775
        %v843 = vsel %vm808, %v832, %v778
        %v845 = vsel %vm808, %v835, %v780
        %v847 = vsel %vm808, %v838, %v782
        %v849 = vsel %vm808, %v841, %v784
        %v851 = vsel %vm817, %v843, %v787
        %v854 = vsel %vm817, %v845, %v789
        %v857 = vsel %vm817, %v847, %v791
        %v860 = vsel %vm817, %v849, %v793
        %v862 = vld [vmem:[%s3] sm:$0xf]
        %v863 = vld [vmem:[%s3 + $0x4] sm:$0xf]
        %v864 = vld [vmem:[%s3 + $0x8] sm:$0xf]
        %v865 = vld [vmem:[%s3 + $0xc] sm:$0xf]
        %v866 = vld [vmem:[%s3 + $0x10] sm:$0xf]
        %v867 = vld [vmem:[%s3 + $0x14] sm:$0xf]
        %v868 = vld [vmem:[%s3 + $0x18] sm:$0xf]
        %v869 = vld [vmem:[%s3 + $0x1c] sm:$0xf]
        %v870 = vld [vmem:[%s3 + $0x20] sm:$0xf]
        %v871 = vld [vmem:[%s3 + $0x24] sm:$0xf]
        %v872 = vld [vmem:[%s3 + $0x28] sm:$0xf]
        %v873 = vld [vmem:[%s3 + $0x2c] sm:$0xf]
        %v874 = vld [vmem:[%s3 + $0x30] sm:$0xf]
        %v875 = vld [vmem:[%s3 + $0x34] sm:$0xf]
        %v876 = vld [vmem:[%s3 + $0x38] sm:$0xf]
        %v877 = vld [vmem:[%s3 + $0x3c] sm:$0xf]
        %v878 = vld [vmem:[%s3 + $0x40] sm:$0xf]
        %v879 = vld [vmem:[%s3 + $0x44] sm:$0xf]
        %v880 = vld [vmem:[%s3 + $0x48] sm:$0xf]
        %v881 = vld [vmem:[%s3 + $0x4c] sm:$0xf]
        %v882 = vld [vmem:[%s3 + $0x50] sm:$0xf]
        %v883 = vld [vmem:[%s3 + $0x54] sm:$0xf]
        %v884 = vld [vmem:[%s3 + $0x58] sm:$0xf]
        %v885 = vld [vmem:[%s3 + $0x5c] sm:$0xf]
        %v886 = vld [vmem:[%s3 + $0x60] sm:$0xf]
        %v887 = vld [vmem:[%s3 + $0x64] sm:$0xf]
        %v888 = vld [vmem:[%s3 + $0x68] sm:$0xf]
        %v889 = vld [vmem:[%s3 + $0x6c] sm:$0xf]
        %v890 = vld [vmem:[%s3 + $0x70] sm:$0xf]
        %v891 = vld [vmem:[%s3 + $0x74] sm:$0xf]
        %v892 = vld [vmem:[%s3 + $0x78] sm:$0xf]
        %v893 = vld [vmem:[%s3 + $0x7c] sm:$0xf]
        %v894 = vld [vmem:[%s3 + $0x80] sm:$0xf]
        %v895 = vld [vmem:[%s3 + $0x84] sm:$0xf]
        %v896 = vld [vmem:[%s3 + $0x88] sm:$0xf]
        %v897 = vld [vmem:[%s3 + $0x8c] sm:$0xf]
        %v898 = vld [vmem:[%s4] sm:$0x1]
        %v900 = vlaneseq
        %v901 = vshrl.u32 %v900, 7
        %v902 = vsub.s32 0, %v901
        %v903 = vrot.slane %v898, %v902
        %v941 = vunpack.c.l.b16 %v862
        %v942 = vunpack.c.l.b16 %v863
        %v943 = vunpack.c.l.b16 %v864
        %v944 = vunpack.c.l.b16 %v865
        %v945 = vunpack.c.l.b16 %v866
        %v946 = vunpack.c.l.b16 %v867
        %v947 = vunpack.c.l.b16 %v868
        %v948 = vunpack.c.l.b16 %v869
        %v949 = vunpack.c.l.b16 %v870
        %v950 = vunpack.c.l.b16 %v871
        %v951 = vunpack.c.l.b16 %v872
        %v952 = vunpack.c.l.b16 %v873
        %v953 = vunpack.c.l.b16 %v874
        %v954 = vunpack.c.l.b16 %v875
        %v955 = vunpack.c.l.b16 %v876
        %v956 = vunpack.c.l.b16 %v877
        %v957 = vunpack.c.l.b16 %v878
        %v958 = vunpack.c.l.b16 %v879
        %v959 = vunpack.c.l.b16 %v880
        %v960 = vunpack.c.l.b16 %v881
        %v961 = vunpack.c.l.b16 %v882
        %v962 = vunpack.c.l.b16 %v883
        %v963 = vunpack.c.l.b16 %v884
        %v964 = vunpack.c.l.b16 %v885
        %v965 = vunpack.c.l.b16 %v886
        %v966 = vunpack.c.l.b16 %v887
        %v967 = vunpack.c.l.b16 %v888
        %v968 = vunpack.c.l.b16 %v889
        %v969 = vunpack.c.l.b16 %v890
        %v970 = vunpack.c.l.b16 %v891
        %v971 = vunpack.c.l.b16 %v892
        %v972 = vunpack.c.l.b16 %v893
        %v973 = vunpack.c.l.b16 %v894
        %v974 = vunpack.c.l.b16 %v895
        %v975 = vunpack.c.l.b16 %v896
        %v976 = vunpack.c.l.b16 %v897
        %v977 = vpack.c.b16 %v942, %v941
        %v978 = vpack.c.b16 %v944, %v943
        %v979 = vpack.c.b16 %v946, %v945
        %v980 = vpack.c.b16 %v948, %v947
        %v981 = vpack.c.b16 %v950, %v949
        %v982 = vpack.c.b16 %v952, %v951
        %v983 = vpack.c.b16 %v954, %v953
        %v984 = vpack.c.b16 %v956, %v955
        %v985 = vpack.c.b16 %v958, %v957
        %v986 = vpack.c.b16 %v960, %v959
        %v987 = vpack.c.b16 %v962, %v961
        %v988 = vpack.c.b16 %v964, %v963
        %v989 = vpack.c.b16 %v966, %v965
        %v990 = vpack.c.b16 %v968, %v967
        %v991 = vpack.c.b16 %v970, %v969
        %v992 = vpack.c.b16 %v972, %v971
        %v993 = vpack.c.b16 %v974, %v973
        %v994 = vpack.c.b16 %v976, %v975
        %v1014 = vsel %vm795, %v735, 0
        %v1017 = vsel %vm795, %v736, 0
        %v1020 = vsel %vm795, %v737, 0
        %v1023 = vsel %vm795, %v794, 0
        %1025 = vmatprep.subr.bf16.mxu0 0
        %1026 = vmatpush1.bf16.msra.mxu0 %v977
        %1027 = vmatprep.subr.bf16.mxu0 0
        %1028 = vmatpush1.bf16.msra.mxu0 %v978
        %1029 = vmatprep.subr.bf16.mxu0 0
        %1030 = vmatpush1.bf16.msra.mxu0 %v979
        %1031 = vmatprep.subr.bf16.mxu0 0
        %1032 = vmatpush1.bf16.msra.mxu0 %v980
        %1033 = vmatprep.subr.bf16.mxu0 0
        %1034 = vmatpush1.bf16.msra.mxu0 %v981
        %1035 = vmatprep.subr.bf16.mxu0 0
        %1036 = vmatpush1.bf16.msra.mxu0 %v982
        %1037 = vmatprep.subr.bf16.mxu0 0
        %1038 = vmatpush1.bf16.msra.mxu0 %v983
        %1039 = vmatprep.subr.bf16.mxu0 0
        %1040 = vmatpush1.bf16.msra.mxu0 %v984
        %1041 = vmatprep.subr.bf16.mxu0 0
        %1042 = vmatpush1.bf16.msra.mxu0 %v985
        %1043 = vmatprep.subr.bf16.mxu0 0
        %1044 = vmatpush1.bf16.msra.mxu0 %v986
        %1045 = vmatprep.subr.bf16.mxu0 0
        %1046 = vmatpush1.bf16.msra.mxu0 %v987
        %1047 = vmatprep.subr.bf16.mxu0 0
        %1048 = vmatpush1.bf16.msra.mxu0 %v988
        %1049 = vmatprep.subr.bf16.mxu0 0
        %1050 = vmatpush1.bf16.msra.mxu0 %v989
        %1051 = vmatprep.subr.bf16.mxu0 0
        %1052 = vmatpush1.bf16.msra.mxu0 %v990
        %1053 = vmatprep.subr.bf16.mxu0 0
        %1054 = vmatpush1.bf16.msra.mxu0 %v991
        %1055 = vmatprep.subr.bf16.mxu0 0
        %1056 = vmatpush1.bf16.msra.mxu0 %v992
        %1057 = vmatprep.mubr.bf16.mxu0 %v851
        %1058 = vmatmul.mubr.bf16.gmra.mrb[0].mxu0 %v819
        %v1059 = vpop.f32.mrb[0].mxu0
        %v1060 = vadd.f32 %v903, %v1059
        %v1061 = vpop.f32.mrb[0].mxu0
        %v1062 = vpop.f32.mrb[0].mxu0
        %v1063 = vadd.f32 %v903, %v1062
        %v1064 = vpop.f32.mrb[0].mxu0
        %1065 = vmatprep.mubr.bf16.mxu0 %v854
        %1066 = vmatmul.mubr.bf16.gmra.mrb[0].mxu0 %v822
        %v1067 = vpop.f32.mrb[0].mxu0
        %v1068 = vadd.f32 %v903, %v1067
        %v1069 = vpop.f32.mrb[0].mxu0
        %v1070 = vpop.f32.mrb[0].mxu0
        %v1071 = vadd.f32 %v903, %v1070
        %v1072 = vpop.f32.mrb[0].mxu0
        %1073 = vmatprep.mubr.bf16.mxu0 %v857
        %1074 = vmatmul.mubr.bf16.gmra.mrb[0].mxu0 %v825
        %v1075 = vpop.f32.mrb[0].mxu0
        %v1076 = vadd.f32 %v903, %v1075
        %v1077 = vpop.f32.mrb[0].mxu0
        %v1078 = vpop.f32.mrb[0].mxu0
        %v1079 = vadd.f32 %v903, %v1078
        %v1080 = vpop.f32.mrb[0].mxu0
        %1081 = vmatprep.mubr.bf16.mxu0 %v860
        %1082 = vmatmul.mubr.bf16.gmra.mrb[0].mxu0 %v828
        %v1083 = vpop.f32.mrb[0].mxu0
        %v1084 = vadd.f32 %v903, %v1083
        %v1085 = vpop.f32.mrb[0].mxu0
        %v1086 = vpop.f32.mrb[0].mxu0
        %v1087 = vadd.f32 %v903, %v1086
        %v1088 = vpop.f32.mrb[0].mxu0
        %1089 = vdwg.mxu0
        %1090 = vmatprep.subr.bf16.mxu0 0
        %1091 = vmatpush1.bf16.msra.mxu0 %v993
        %1092 = vmatprep.subr.bf16.mxu0 0
        %1093 = vmatpush1.bf16.msra.mxu0 %v994
        %1094 = vmatprep.subr.bf16.mxu0 0
        %1095 = vmatpush1.bf16.msra.mxu0 0
        %1096 = vmatprep.subr.bf16.mxu0 0
        %1097 = vmatpush1.bf16.msra.mxu0 0
        %1098 = vmatprep.subr.bf16.mxu0 0
        %1099 = vmatpush1.bf16.msra.mxu0 0
        %1100 = vmatprep.subr.bf16.mxu0 0
        %1101 = vmatpush1.bf16.msra.mxu0 0
        %1102 = vmatprep.subr.bf16.mxu0 0
        %1103 = vmatpush1.bf16.msra.mxu0 0
        %1104 = vmatprep.subr.bf16.mxu0 0
        %1105 = vmatpush1.bf16.msra.mxu0 0
        %1106 = vmatprep.subr.bf16.mxu0 0
        %1107 = vmatpush1.bf16.msra.mxu0 0
        %1108 = vmatprep.subr.bf16.mxu0 0
        %1109 = vmatpush1.bf16.msra.mxu0 0
        %1110 = vmatprep.subr.bf16.mxu0 0
        %1111 = vmatpush1.bf16.msra.mxu0 0
        %1112 = vmatprep.subr.bf16.mxu0 0
        %1113 = vmatpush1.bf16.msra.mxu0 0
        %1114 = vmatprep.subr.bf16.mxu0 0
        %1115 = vmatpush1.bf16.msra.mxu0 0
        %1116 = vmatprep.subr.bf16.mxu0 0
        %1117 = vmatpush1.bf16.msra.mxu0 0
        %1118 = vmatprep.subr.bf16.mxu0 0
        %1119 = vmatpush1.bf16.msra.mxu0 0
        %1120 = vmatprep.subr.bf16.mxu0 0
        %1121 = vmatpush1.bf16.msra.mxu0 0
        %1122 = vmatprep.mubr.bf16.mxu0 0
        %1123 = vmatmul.mubr.bf16.gmra.mrb[0].mxu0 %v1014
        %v1124 = vpop.f32.mrb[0].mxu0
        %v1125 = vadd.f32 %v1060, %v1124
        %v1126 = vpop.f32.mrb[0].mxu0
        %v1127 = vpop.f32.mrb[0].mxu0
        %v1128 = vadd.f32 %v1063, %v1127
        %v1129 = vpop.f32.mrb[0].mxu0
        %1130 = vmatprep.mubr.bf16.mxu0 0
        %1131 = vmatmul.mubr.bf16.gmra.mrb[0].mxu0 %v1017
        %v1132 = vpop.f32.mrb[0].mxu0
        %v1133 = vadd.f32 %v1068, %v1132
        %v1134 = vpop.f32.mrb[0].mxu0
        %v1135 = vpop.f32.mrb[0].mxu0
        %v1136 = vadd.f32 %v1071, %v1135
        %v1137 = vpop.f32.mrb[0].mxu0
        %1138 = vmatprep.mubr.bf16.mxu0 0
        %1139 = vmatmul.mubr.bf16.gmra.mrb[0].mxu0 %v1020
        %v1140 = vpop.f32.mrb[0].mxu0
        %v1141 = vadd.f32 %v1076, %v1140
        %v1142 = vpop.f32.mrb[0].mxu0
        %v1143 = vpop.f32.mrb[0].mxu0
        %v1144 = vadd.f32 %v1079, %v1143
        %v1145 = vpop.f32.mrb[0].mxu0
        %1146 = vmatprep.mubr.bf16.mxu0 0
        %1147 = vmatmul.mubr.bf16.gmra.mrb[0].mxu0 %v1023
        %v1148 = vpop.f32.mrb[0].mxu0
        %v1149 = vadd.f32 %v1084, %v1148
        %v1150 = vpop.f32.mrb[0].mxu0
        %v1151 = vpop.f32.mrb[0].mxu0
        %v1152 = vadd.f32 %v1087, %v1151
        %v1153 = vpop.f32.mrb[0].mxu0
        %1154 = vdwg.mxu0
        %v1155 = vmax.f32 %v1125, 0.0
        %v1156 = vmax.f32 %v1128, 0.0
        %v1157 = vmax.f32 %v1133, 0.0
        %v1158 = vmax.f32 %v1136, 0.0
        %v1159 = vmax.f32 %v1141, 0.0
        %v1160 = vmax.f32 %v1144, 0.0
        %v1161 = vmax.f32 %v1149, 0.0
        %v1162 = vmax.f32 %v1152, 0.0
        %1163 = vst.msk [vmem:[%s217] sm:$0xff] %vm795, %v1155
        %1164 = vst.msk [vmem:[%s217 + $0x8] sm:$0xff] %vm795, %v1156
        %1165 = vst.msk [vmem:[%s217 + $0x10] sm:$0xff] %vm795, %v1157
        %1166 = vst.msk [vmem:[%s217 + $0x18] sm:$0xff] %vm795, %v1158
        %1167 = vst.msk [vmem:[%s217 + $0x20] sm:$0xff] %vm795, %v1159
        %1168 = vst.msk [vmem:[%s217 + $0x28] sm:$0xff] %vm795, %v1160
        %1169 = vst.msk [vmem:[%s217 + $0x30] sm:$0xff] %vm795, %v1161
        %1170 = vst.msk [vmem:[%s217 + $0x38] sm:$0xff] %vm795, %v1162
        %s1171 = sand.u32 %s137, 1
        %s1172 = scalar_lea.sflag [#allocation3], %s1171
        %s1173 = sand.u32 %s137, 1
        %s1174 = smul.addr %s1173, 64
        %s1175 = scalar_lea.vmem [#allocation2], %s1174
        // Predicated region
        $region41: #{stem_forward.1} parent=39 // pred_check
          %p1176 = pneg %p147
        $region42: #{stem_forward.1} parent=39 // pred_check_branch
          %1178 = sbr.rel (%p1176) target = $region44
        $region43: #{stem_forward.1} parent=39 // pred_region
          %s1180 = ssub.s32 1024, 1024
          %1181 = vsyncadd %s1172, %s1180
          %s1182 = smul.addr %s19, 8
          %s1183 = smul.addr %s1182, 128
          %s1184 = scalar_lea.hbm %s5, %s1183
          %s1185 = sshll.u32 %s1175, 4
          %s1186 = int_to_ptr.vmem [resolvable:$true] %s1185
          %1191 = dma.vmem_to_hbm [thread:$0]  %s1186, 1024, %s1184, %s1172, 128, 128, 8
        $region44: #{stem_forward.1} parent=39 // pred_fallthru
          _
      $region40: #{stem_forward.1} parent=5 // pred_fallthru
        _
      %p1192 = scmp.le.s32.totalorder 2, %s14
      // Predicated region
      $region45: #{stem_forward.1} parent=5 // pred_check
        %p1193 = pneg %p1192
      $region46: #{stem_forward.1} parent=5 // pred_check_branch
        %1195 = sbr.rel (%p1193) target = $region48
      $region47: #{stem_forward.1} parent=5 // pred_region
        %s1196 = ssub.s32 %s14, 2
        // Predicated region
        $region49: #{stem_forward.1} parent=47 // pred_check
          %p1197 = pneg %p153
        $region50: #{stem_forward.1} parent=47 // pred_check_branch
          %1199 = sbr.rel (%p1197) target = $region52
        $region51: #{stem_forward.1} parent=47 // pred_region
          %s1200 = sand.u32 %s138, 1
          %s1201 = scalar_lea.sflag [#allocation3], %s1200
          %s1202 = sand.u32 %s138, 1
          %s1203 = smul.addr %s1202, 64
          %s1204 = scalar_lea.vmem [#allocation2], %s1203
          %1205 = dma.done %s1201, 1024
        $region52: #{stem_forward.1} parent=47 // pred_fallthru
          _
      $region48: #{stem_forward.1} parent=5 // pred_fallthru
        _
    $region6: #{stem_forward.1} parent=1 // loop_footer
      %s18 = sadd.s32 1, %s14
    $region7: #{stem_forward.1} parent=1 // loop_footer_branch
      %13 = sbr.rel target = $region3
    $region8: #{stem_forward.1} parent=1 // loop_exit
      _
    %1206 = vsyncpa [#allocation3], 1
    %s1207 = scalar_lea.sflag [#allocation3], 1
    %1208 = vsyncpa %s1207, 1

</llo_original>
